<compile_context>
chip_gen: v7x
topology: tpu7x:2x2x1
jax: 0.10.0
libtpu: 0.0.40
codegen_flags: <defaults>
</compile_context>

<pallas_src>
import functools

import numpy as np
import jax
import jax.numpy as jnp
from jax.experimental import pallas as pl
from jax.experimental.pallas import tpu as pltpu

_PAD = 2                      # 5x5 'same' halo
_MIB = 1024 * 1024


def _make_srm_weights():
    """Deterministic SRM filter bank (Cout=3, Cin=3, 5, 5) OIHW — reference only."""
    q = [4.0, 12.0, 2.0]
    filter1 = [[0, 0, 0, 0, 0],
               [0, -1, 2, -1, 0],
               [0, 2, -4, 2, 0],
               [0, -1, 2, -1, 0],
               [0, 0, 0, 0, 0]]
    filter2 = [[-1, 2, -2, 2, -1],
               [2, -6, 8, -6, 2],
               [-2, 8, -12, 8, -2],
               [2, -6, 8, -6, 2],
               [-1, 2, -2, 2, -1]]
    filter3 = [[0, 0, 0, 0, 0],
               [0, 0, 0, 0, 0],
               [0, 1, -2, 1, 0],
               [0, 0, 0, 0, 0],
               [0, 0, 0, 0, 0]]
    f1 = np.asarray(filter1, dtype=np.float32) / q[0]
    f2 = np.asarray(filter2, dtype=np.float32) / q[1]
    f3 = np.asarray(filter3, dtype=np.float32) / q[2]
    filters = np.asarray([[f1, f1, f1], [f2, f2, f2], [f3, f3, f3]],
                         dtype=np.float32)
    return jnp.asarray(filters)  # (3, 3, 5, 5) OIHW


def _srm_kernel(x_ref, o_ref, xp_ref, h1_ref, h2_ref):
    # x_ref : (NB, 3, H, W)   input block (floating dtype)
    # o_ref : (NB, 3, H, W)   f32 output block (all 3 SRM channels)
    # xp_ref: (NB, H+4, W+4)  f32 scratch — channel-summed input with 2-px zero halo
    # h1_ref: (NB, H+4, W)    f32 scratch — xp[.., c+1] + xp[.., c+3]   (inner column pair)
    # h2_ref: (NB, H+4, W)    f32 scratch — xp[.., c+0] + xp[.., c+4]   (outer column pair)
    NB, _, H, W = o_ref.shape

    # Zero the halo scratch once; only its interior is (re)written below, so the
    # 2-px zero border (the 'same' padding) persists across all grid steps.
    @pl.when(pl.program_id(0) == 0)
    def _():
        xp_ref[...] = jnp.zeros(xp_ref.shape, jnp.float32)

    # Channel pre-sum: the three SRM filters are identical across input channels.
    xp_ref[:, _PAD:_PAD + H, _PAD:_PAD + W] = (
        x_ref[:, 0, :, :].astype(jnp.float32)
        + x_ref[:, 1, :, :].astype(jnp.float32)
        + x_ref[:, 2, :, :].astype(jnp.float32))

    # Horizontal taps, folded by the filters' left/right symmetry. Static
    # lane-offset ref slices; only the W output columns are ever needed.
    def col(j):
        return xp_ref[:, :, j:j + W]              # (NB, H+4, W)

    h1_ref[...] = col(1) + col(3)
    h2_ref[...] = col(0) + col(4)

    # Vertical taps = static sublane-offset ref slices (pure addressing).
    def xc(k):                                    # center column (kx == 2)
        return xp_ref[:, k:k + H, _PAD:_PAD + W]

    def h1(k):
        return h1_ref[:, k:k + H, :]

    def h2(k):
        return h2_ref[:, k:k + H, :]

    # Symmetry-grouped tap sums shared by the three SRM filters
    # (weights baked in: filter1/4, filter2/12, filter3/2).
    c0 = xc(2)                                    # (2,2) center tap
    d0 = h1(2)                                    # (2,1)+(2,3)
    o_ref[:, 2, :, :] = 0.5 * d0 - c0             # filter3 / 2

    a0 = h1(1) + h1(3)                            # inner 3x3 corners
    b0 = (xc(1) + xc(3)) + d0                     # inner 3x3 edges
    o_ref[:, 0, :, :] = 0.5 * b0 - 0.25 * a0 - c0  # filter1 / 4

    g1 = h2(0) + h2(4)                            # outer corners    (w = -1/12)
    g2 = (h1(0) + h1(4)) + (h2(1) + h2(3))        # outer '+2' ring  (w = +2/12)
    g3 = (xc(0) + xc(4)) + h2(2)                  # outer axis taps  (w = -2/12)
    o_ref[:, 1, :, :] = (((2.0 / 3.0) * b0 - 0.5 * a0 - c0)
                         + ((1.0 / 6.0) * g2
                            - (1.0 / 12.0) * g1
                            - (1.0 / 6.0) * g3))  # filter2 / 12


@functools.lru_cache(maxsize=1)
def _vmem_physical_bytes():
    try:
        info = pltpu.get_tpu_info()
        cap = int(getattr(info, "vmem_capacity_bytes", 0) or 0)
        if cap > 0:
            return cap
    except Exception:
        pass
    return 64 * _MIB            # conservative fallback: v7x has the smallest VMEM


def _choose_batch_block(n, h, w, budget_bytes):
    """Largest divisor NB of n whose estimated per-step VMEM footprint fits."""
    hp, wp = h + 2 * _PAD, w + 2 * _PAD
    per_img = 4 * (2 * 3 * h * w           # input block, double buffered
                   + 2 * 3 * h * w         # output block, double buffered
                   + hp * wp + 2 * hp * w  # halo + combined-column scratch
                   + 8 * h * w)            # live element-wise temporaries
    nb = 1
    for d in range(1, n + 1):
        if n % d == 0 and d * per_img <= budget_bytes:
            nb = d
    return nb, per_img


def srm_filter(x):
    """x: (N, 3, H, W) NCHW, floating dtype. Returns SRM residuals (N, 3, H, W) f32."""
    N, Cin, H, W = x.shape
    assert Cin == 3, "SRMFilter is a fixed 3->3 channel filter bank"
    if not jnp.issubdtype(x.dtype, jnp.floating):
        x = x.astype(jnp.float32)

    phys = _vmem_physical_bytes()
    NB, per_img = _choose_batch_block(N, H, W, budget_bytes=phys // 2)
    vmem_limit = int(min(int(0.8 * phys), max(32 * _MIB, int(1.25 * per_img * NB))))
    # TODO(synk): for very large single images (per_img > phys//2) tile H with a
    # 4-row overlapping halo (manual DMA or Element-offset index_map) and mark
    # that axis "parallel" so both v7x TensorCores are used.
    # TODO(synk): for W far below 128, pack multiple images/rows into the lane
    # dimension in-kernel to raise VPU lane utilization (HBM traffic is already
    # minimal, so this only matters once the op stops being bandwidth-bound).

    Hp, Wp = H + 2 * _PAD, W + 2 * _PAD
    return pl.pallas_call(
        _srm_kernel,
        out_shape=jax.ShapeDtypeStruct((N, 3, H, W), jnp.float32),
        grid=(N // NB,),
        in_specs=[pl.BlockSpec((NB, 3, H, W), lambda n: (n, 0, 0, 0))],
        out_specs=pl.BlockSpec((NB, 3, H, W), lambda n: (n, 0, 0, 0)),
        scratch_shapes=[
            pltpu.VMEM((NB, Hp, Wp), jnp.float32),   # halo-padded channel sum
            pltpu.VMEM((NB, Hp, W), jnp.float32),    # columns kx=1 + kx=3
            pltpu.VMEM((NB, Hp, W), jnp.float32),    # columns kx=0 + kx=4
        ],
        compiler_params=pltpu.CompilerParams(
            dimension_semantics=("parallel",),
            vmem_limit_bytes=vmem_limit),
    )(x)


if __name__ == "__main__":
    key = jax.random.PRNGKey(0)
    x = jax.random.normal(key, (2, 3, 16, 16), dtype=jnp.float32)  # NCHW

    out = jax.block_until_ready(srm_filter(x))

    # Reference: same-padded conv2d with the fixed SRM bank (matches PyTorch
    # SameConv2d, stride 1, no bias).
    weights = _make_srm_weights()
    ref = jax.lax.conv_general_dilated(
        x, weights, window_strides=(1, 1), padding="SAME",
        dimension_numbers=("NCHW", "OIHW", "NCHW"),
        precision=jax.lax.Precision.HIGHEST)
    ref = jax.block_until_ready(ref)

    assert out.shape == (2, 3, 16, 16) and out.dtype == jnp.float32
    np.testing.assert_allclose(np.asarray(out), np.asarray(ref),
                               rtol=1e-5, atol=1e-4)
    print("KERNEL_OK")
</pallas_src>

<mosaic_0001>
module attributes {stable_mosaic.version = 11 : i64} {
  func.func @_srm_kernel(%arg0: i32, %arg1: memref<2x3x16x16xf32, #tpu.memory_space<vmem>>, %arg2: memref<2x3x16x16xf32, #tpu.memory_space<vmem>>, %arg3: memref<2x20x20xf32, #tpu.memory_space<vmem>>, %arg4: memref<2x20x16xf32, #tpu.memory_space<vmem>>, %arg5: memref<2x20x16xf32, #tpu.memory_space<vmem>>) attributes {dimension_semantics = [#tpu.dimension_semantics<parallel>], iteration_bounds = array<i64: 1>, scalar_prefetch = 0 : i64, scratch_operands = 3 : i64, tpu.core_type = #tpu.core_type<tc>, window_params = [{transform_indices = @transform_0, window_bounds = array<i64: 2, 3, 16, 16>}, {transform_indices = @transform_1, window_bounds = array<i64: 2, 3, 16, 16>}]} {
    %c0_i32 = arith.constant 0 : i32
    %0 = arith.cmpi eq, %arg0, %c0_i32 : i32
    %1 = arith.extui %0 : i1 to i32
    %c0_i32_0 = arith.constant 0 : i32
    %2 = arith.cmpi ne, %1, %c0_i32_0 : i32
    scf.if %2 {
      %cst_93 = arith.constant 0.000000e+00 : f32
      %77 = vector.broadcast %cst_93 : f32 to vector<2x20x20xf32>
      %c0_94 = arith.constant 0 : index
      %c0_95 = arith.constant 0 : index
      %c0_96 = arith.constant 0 : index
      %78 = vector.load %arg3[%c0_94, %c0_95, %c0_96] : memref<2x20x20xf32, #tpu.memory_space<vmem>>, vector<2x20x20xf32>
      tpu.vector_store %arg3[%c0_94, %c0_95, %c0_96], %77 {strides = array<i32>} : memref<2x20x20xf32, #tpu.memory_space<vmem>>, vector<2x20x20xf32>,
    } else {
    }
    %c0 = arith.constant 0 : index
    %c0_1 = arith.constant 0 : index
    %c0_2 = arith.constant 0 : index
    %c0_3 = arith.constant 0 : index
    %3 = vector.load %arg1[%c0, %c0_1, %c0_2, %c0_3] : memref<2x3x16x16xf32, #tpu.memory_space<vmem>>, vector<2x1x16x16xf32>
    %4 = vector.shape_cast %3 : vector<2x1x16x16xf32> to vector<2x16x16xf32>
    %c0_4 = arith.constant 0 : index
    %c1 = arith.constant 1 : index
    %c0_5 = arith.constant 0 : index
    %c0_6 = arith.constant 0 : index
    %5 = vector.load %arg1[%c0_4, %c1, %c0_5, %c0_6] : memref<2x3x16x16xf32, #tpu.memory_space<vmem>>, vector<2x1x16x16xf32>
    %6 = vector.shape_cast %5 : vector<2x1x16x16xf32> to vector<2x16x16xf32>
    %7 = arith.addf %4, %6 : vector<2x16x16xf32>
    %c0_7 = arith.constant 0 : index
    %c2 = arith.constant 2 : index
    %c0_8 = arith.constant 0 : index
    %c0_9 = arith.constant 0 : index
    %8 = vector.load %arg1[%c0_7, %c2, %c0_8, %c0_9] : memref<2x3x16x16xf32, #tpu.memory_space<vmem>>, vector<2x1x16x16xf32>
    %9 = vector.shape_cast %8 : vector<2x1x16x16xf32> to vector<2x16x16xf32>
    %10 = arith.addf %7, %9 : vector<2x16x16xf32>
    %c0_10 = arith.constant 0 : index
    %c2_11 = arith.constant 2 : index
    %c2_12 = arith.constant 2 : index
    %11 = vector.load %arg3[%c0_10, %c2_11, %c2_12] : memref<2x20x20xf32, #tpu.memory_space<vmem>>, vector<2x16x16xf32>
    tpu.vector_store %arg3[%c0_10, %c2_11, %c2_12], %10 {strides = array<i32>} : memref<2x20x20xf32, #tpu.memory_space<vmem>>, vector<2x16x16xf32>,
    %c0_13 = arith.constant 0 : index
    %c0_14 = arith.constant 0 : index
    %c1_15 = arith.constant 1 : index
    %12 = vector.load %arg3[%c0_13, %c0_14, %c1_15] : memref<2x20x20xf32, #tpu.memory_space<vmem>>, vector<2x20x16xf32>
    %c0_16 = arith.constant 0 : index
    %c0_17 = arith.constant 0 : index
    %c3 = arith.constant 3 : index
    %13 = vector.load %arg3[%c0_16, %c0_17, %c3] : memref<2x20x20xf32, #tpu.memory_space<vmem>>, vector<2x20x16xf32>
    %14 = arith.addf %12, %13 : vector<2x20x16xf32>
    %c0_18 = arith.constant 0 : index
    %c0_19 = arith.constant 0 : index
    %c0_20 = arith.constant 0 : index
    %15 = vector.load %arg4[%c0_18, %c0_19, %c0_20] : memref<2x20x16xf32, #tpu.memory_space<vmem>>, vector<2x20x16xf32>
    tpu.vector_store %arg4[%c0_18, %c0_19, %c0_20], %14 {strides = array<i32>} : memref<2x20x16xf32, #tpu.memory_space<vmem>>, vector<2x20x16xf32>,
    %c0_21 = arith.constant 0 : index
    %c0_22 = arith.constant 0 : index
    %c0_23 = arith.constant 0 : index
    %16 = vector.load %arg3[%c0_21, %c0_22, %c0_23] : memref<2x20x20xf32, #tpu.memory_space<vmem>>, vector<2x20x16xf32>
    %c0_24 = arith.constant 0 : index
    %c0_25 = arith.constant 0 : index
    %c4 = arith.constant 4 : index
    %17 = vector.load %arg3[%c0_24, %c0_25, %c4] : memref<2x20x20xf32, #tpu.memory_space<vmem>>, vector<2x20x16xf32>
    %18 = arith.addf %16, %17 : vector<2x20x16xf32>
    %c0_26 = arith.constant 0 : index
    %c0_27 = arith.constant 0 : index
    %c0_28 = arith.constant 0 : index
    %19 = vector.load %arg5[%c0_26, %c0_27, %c0_28] : memref<2x20x16xf32, #tpu.memory_space<vmem>>, vector<2x20x16xf32>
    tpu.vector_store %arg5[%c0_26, %c0_27, %c0_28], %18 {strides = array<i32>} : memref<2x20x16xf32, #tpu.memory_space<vmem>>, vector<2x20x16xf32>,
    %c0_29 = arith.constant 0 : index
    %c2_30 = arith.constant 2 : index
    %c2_31 = arith.constant 2 : index
    %20 = vector.load %arg3[%c0_29, %c2_30, %c2_31] : memref<2x20x20xf32, #tpu.memory_space<vmem>>, vector<2x16x16xf32>
    %c0_32 = arith.constant 0 : index
    %c2_33 = arith.constant 2 : index
    %c0_34 = arith.constant 0 : index
    %21 = vector.load %arg4[%c0_32, %c2_33, %c0_34] : memref<2x20x16xf32, #tpu.memory_space<vmem>>, vector<2x16x16xf32>
    %cst = arith.constant 5.000000e-01 : f32
    %22 = vector.broadcast %cst : f32 to vector<2x16x16xf32>
    %23 = arith.mulf %22, %21 : vector<2x16x16xf32>
    %24 = arith.subf %23, %20 : vector<2x16x16xf32>
    %c0_35 = arith.constant 0 : index
    %c2_36 = arith.constant 2 : index
    %c0_37 = arith.constant 0 : index
    %c0_38 = arith.constant 0 : index
    %25 = vector.load %arg2[%c0_35, %c2_36, %c0_37, %c0_38] : memref<2x3x16x16xf32, #tpu.memory_space<vmem>>, vector<2x1x16x16xf32>
    %26 = vector.shape_cast %25 : vector<2x1x16x16xf32> to vector<2x16x16xf32>
    %27 = vector.shape_cast %24 : vector<2x16x16xf32> to vector<2x1x16x16xf32>
    tpu.vector_store %arg2[%c0_35, %c2_36, %c0_37, %c0_38], %27 {strides = array<i32>} : memref<2x3x16x16xf32, #tpu.memory_space<vmem>>, vector<2x1x16x16xf32>,
    %c0_39 = arith.constant 0 : index
    %c1_40 = arith.constant 1 : index
    %c0_41 = arith.constant 0 : index
    %28 = vector.load %arg4[%c0_39, %c1_40, %c0_41] : memref<2x20x16xf32, #tpu.memory_space<vmem>>, vector<2x16x16xf32>
    %c0_42 = arith.constant 0 : index
    %c3_43 = arith.constant 3 : index
    %c0_44 = arith.constant 0 : index
    %29 = vector.load %arg4[%c0_42, %c3_43, %c0_44] : memref<2x20x16xf32, #tpu.memory_space<vmem>>, vector<2x16x16xf32>
    %30 = arith.addf %28, %29 : vector<2x16x16xf32>
    %c0_45 = arith.constant 0 : index
    %c1_46 = arith.constant 1 : index
    %c2_47 = arith.constant 2 : index
    %31 = vector.load %arg3[%c0_45, %c1_46, %c2_47] : memref<2x20x20xf32, #tpu.memory_space<vmem>>, vector<2x16x16xf32>
    %c0_48 = arith.constant 0 : index
    %c3_49 = arith.constant 3 : index
    %c2_50 = arith.constant 2 : index
    %32 = vector.load %arg3[%c0_48, %c3_49, %c2_50] : memref<2x20x20xf32, #tpu.memory_space<vmem>>, vector<2x16x16xf32>
    %33 = arith.addf %31, %32 : vector<2x16x16xf32>
    %34 = arith.addf %33, %21 : vector<2x16x16xf32>
    %cst_51 = arith.constant 5.000000e-01 : f32
    %35 = vector.broadcast %cst_51 : f32 to vector<2x16x16xf32>
    %36 = arith.mulf %35, %34 : vector<2x16x16xf32>
    %cst_52 = arith.constant 2.500000e-01 : f32
    %37 = vector.broadcast %cst_52 : f32 to vector<2x16x16xf32>
    %38 = arith.mulf %37, %30 : vector<2x16x16xf32>
    %39 = arith.subf %36, %38 : vector<2x16x16xf32>
    %40 = arith.subf %39, %20 : vector<2x16x16xf32>
    %c0_53 = arith.constant 0 : index
    %c0_54 = arith.constant 0 : index
    %c0_55 = arith.constant 0 : index
    %c0_56 = arith.constant 0 : index
    %41 = vector.load %arg2[%c0_53, %c0_54, %c0_55, %c0_56] : memref<2x3x16x16xf32, #tpu.memory_space<vmem>>, vector<2x1x16x16xf32>
    %42 = vector.shape_cast %41 : vector<2x1x16x16xf32> to vector<2x16x16xf32>
    %43 = vector.shape_cast %40 : vector<2x16x16xf32> to vector<2x1x16x16xf32>
    tpu.vector_store %arg2[%c0_53, %c0_54, %c0_55, %c0_56], %43 {strides = array<i32>} : memref<2x3x16x16xf32, #tpu.memory_space<vmem>>, vector<2x1x16x16xf32>,
    %c0_57 = arith.constant 0 : index
    %c0_58 = arith.constant 0 : index
    %c0_59 = arith.constant 0 : index
    %44 = vector.load %arg5[%c0_57, %c0_58, %c0_59] : memref<2x20x16xf32, #tpu.memory_space<vmem>>, vector<2x16x16xf32>
    %c0_60 = arith.constant 0 : index
    %c4_61 = arith.constant 4 : index
    %c0_62 = arith.constant 0 : index
    %45 = vector.load %arg5[%c0_60, %c4_61, %c0_62] : memref<2x20x16xf32, #tpu.memory_space<vmem>>, vector<2x16x16xf32>
    %46 = arith.addf %44, %45 : vector<2x16x16xf32>
    %c0_63 = arith.constant 0 : index
    %c0_64 = arith.constant 0 : index
    %c0_65 = arith.constant 0 : index
    %47 = vector.load %arg4[%c0_63, %c0_64, %c0_65] : memref<2x20x16xf32, #tpu.memory_space<vmem>>, vector<2x16x16xf32>
    %c0_66 = arith.constant 0 : index
    %c4_67 = arith.constant 4 : index
    %c0_68 = arith.constant 0 : index
    %48 = vector.load %arg4[%c0_66, %c4_67, %c0_68] : memref<2x20x16xf32, #tpu.memory_space<vmem>>, vector<2x16x16xf32>
    %49 = arith.addf %47, %48 : vector<2x16x16xf32>
    %c0_69 = arith.constant 0 : index
    %c1_70 = arith.constant 1 : index
    %c0_71 = arith.constant 0 : index
    %50 = vector.load %arg5[%c0_69, %c1_70, %c0_71] : memref<2x20x16xf32, #tpu.memory_space<vmem>>, vector<2x16x16xf32>
    %c0_72 = arith.constant 0 : index
    %c3_73 = arith.constant 3 : index
    %c0_74 = arith.constant 0 : index
    %51 = vector.load %arg5[%c0_72, %c3_73, %c0_74] : memref<2x20x16xf32, #tpu.memory_space<vmem>>, vector<2x16x16xf32>
    %52 = arith.addf %50, %51 : vector<2x16x16xf32>
    %53 = arith.addf %49, %52 : vector<2x16x16xf32>
    %c0_75 = arith.constant 0 : index
    %c0_76 = arith.constant 0 : index
    %c2_77 = arith.constant 2 : index
    %54 = vector.load %arg3[%c0_75, %c0_76, %c2_77] : memref<2x20x20xf32, #tpu.memory_space<vmem>>, vector<2x16x16xf32>
    %c0_78 = arith.constant 0 : index
    %c4_79 = arith.constant 4 : index
    %c2_80 = arith.constant 2 : index
    %55 = vector.load %arg3[%c0_78, %c4_79, %c2_80] : memref<2x20x20xf32, #tpu.memory_space<vmem>>, vector<2x16x16xf32>
    %56 = arith.addf %54, %55 : vector<2x16x16xf32>
    %c0_81 = arith.constant 0 : index
    %c2_82 = arith.constant 2 : index
    %c0_83 = arith.constant 0 : index
    %57 = vector.load %arg5[%c0_81, %c2_82, %c0_83] : memref<2x20x16xf32, #tpu.memory_space<vmem>>, vector<2x16x16xf32>
    %58 = arith.addf %56, %57 : vector<2x16x16xf32>
    %cst_84 = arith.constant 0.666666686 : f32
    %59 = vector.broadcast %cst_84 : f32 to vector<2x16x16xf32>
    %60 = arith.mulf %59, %34 : vector<2x16x16xf32>
    %cst_85 = arith.constant 5.000000e-01 : f32
    %61 = vector.broadcast %cst_85 : f32 to vector<2x16x16xf32>
    %62 = arith.mulf %61, %30 : vector<2x16x16xf32>
    %63 = arith.subf %60, %62 : vector<2x16x16xf32>
    %64 = arith.subf %63, %20 : vector<2x16x16xf32>
    %cst_86 = arith.constant 0.166666672 : f32
    %65 = vector.broadcast %cst_86 : f32 to vector<2x16x16xf32>
    %66 = arith.mulf %65, %53 : vector<2x16x16xf32>
    %cst_87 = arith.constant 0.0833333358 : f32
    %67 = vector.broadcast %cst_87 : f32 to vector<2x16x16xf32>
    %68 = arith.mulf %67, %46 : vector<2x16x16xf32>
    %69 = arith.subf %66, %68 : vector<2x16x16xf32>
    %cst_88 = arith.constant 0.166666672 : f32
    %70 = vector.broadcast %cst_88 : f32 to vector<2x16x16xf32>
    %71 = arith.mulf %70, %58 : vector<2x16x16xf32>
    %72 = arith.subf %69, %71 : vector<2x16x16xf32>
    %73 = arith.addf %64, %72 : vector<2x16x16xf32>
    %c0_89 = arith.constant 0 : index
    %c1_90 = arith.constant 1 : index
    %c0_91 = arith.constant 0 : index
    %c0_92 = arith.constant 0 : index
    %74 = vector.load %arg2[%c0_89, %c1_90, %c0_91, %c0_92] : memref<2x3x16x16xf32, #tpu.memory_space<vmem>>, vector<2x1x16x16xf32>
    %75 = vector.shape_cast %74 : vector<2x1x16x16xf32> to vector<2x16x16xf32>
    %76 = vector.shape_cast %73 : vector<2x16x16xf32> to vector<2x1x16x16xf32>
    tpu.vector_store %arg2[%c0_89, %c1_90, %c0_91, %c0_92], %76 {strides = array<i32>} : memref<2x3x16x16xf32, #tpu.memory_space<vmem>>, vector<2x1x16x16xf32>,
    return
  }
  func.func @transform_0(%arg0: i32) -> (i32, i32, i32, i32) {
    %c0_i32 = arith.constant 0 : i32
    %c0_i32_0 = arith.constant 0 : i32
    %c0_i32_1 = arith.constant 0 : i32
    %c0_i32_2 = arith.constant 0 : i32
    return %arg0, %c0_i32, %c0_i32_0, %c0_i32_1 : i32, i32, i32, i32
  }
  func.func @transform_1(%arg0: i32) -> (i32, i32, i32, i32) {
    %c0_i32 = arith.constant 0 : i32
    %c0_i32_0 = arith.constant 0 : i32
    %c0_i32_1 = arith.constant 0 : i32
    %c0_i32_2 = arith.constant 0 : i32
    return %arg0, %c0_i32, %c0_i32_0, %c0_i32_1 : i32, i32, i32, i32
  }
}

</mosaic_0001>

<llo_original>
// kernel: tpu_custom_call.1
$region0: #{tpu_custom_call.1}
  #allocation0 [shape = 'u32[]', space=smem, size = 0x4, offset = 0x4, fixed_abs, tag = 'smem constant byte address 0x4 - core index']
  #allocation1 [shape = 'u32[144,128]{1,0:T(1,128)}', space=vmem, size = 0x12000, scoped, tag = 'internal scratch']
  #allocation2 [shape = 'f32[2,20,20]{2,1,0:T(8,128)}', space=vmem, size = 0x6000, scoped, tag = 'scratch operand']
  #allocation3 [shape = 'f32[2,20,16]{2,1,0:T(8,128)}', space=vmem, size = 0x6000, scoped, tag = 'scratch operand']
  #allocation4 [shape = 'f32[2,20,16]{2,1,0:T(8,128)}', space=vmem, size = 0x6000, scoped, tag = 'scratch operand']
  %s0 = inlined_call_operand.hbm [shape: f32[2,3,16,16], index: 0, kind: input, shape index: {}]
  %s1 = inlined_call_operand.hbm [shape: f32[2,3,16,16], index: 1, kind: output, shape index: {}]
  %s2 = sld [smem:[#allocation0]]
  $region22: #{tpu_custom_call.1} parent=0
    _
  %s4 = ssub.s32 1, %s2
  %s5 = scalar_select 0, %s4, %s2
  $region1: #{tpu_custom_call.1} parent=0
    #allocation5 [shape = 'u8[49152]{0}', space=vmem, size = 0xc000, scoped, tag = 'input window, operand 0, single buffered']
    #allocation6 [shape = 's32[1]{0}', space=sflag, size = 0x4, scoped, tag = 'scoped memory for tpu_custom_call.1']
    #allocation7 [shape = 's32[1]{0}', space=sflag, size = 0x4, scoped, tag = 'scoped memory for tpu_custom_call.1']
    #allocation8 [shape = 'u8[49152]{0}', space=vmem, size = 0xc000, scoped, tag = 'output window, operand 0, single buffered']
    %6 = vsyncpa [#allocation6], 0
    %7 = vsyncpa [#allocation7], 0
    // Predicated region
    $region2: #{tpu_custom_call.1} parent=1 // pred_check
      _
    $region3: #{tpu_custom_call.1} parent=1 // pred_check_branch
      %9 = sbr.rel (0) target = $region5
    $region4: #{tpu_custom_call.1} parent=1 // pred_region
      %s11 = ssub.s32 1536, 1536
      %12 = vsyncadd [#allocation6], %s11
      %s13 = sshll.u32 [#allocation5], 4
      %s14 = int_to_ptr.vmem [resolvable:$true] %s13
      %19 = dma.hbm_to_vmem [thread:$0]  %s0, 1536, %s14, [#allocation6], 128, 128, 8
    $region5: #{tpu_custom_call.1} parent=1 // pred_fallthru
      _
    // Predicated region
    $region6: #{tpu_custom_call.1} parent=1 // pred_check
      _
    $region7: #{tpu_custom_call.1} parent=1 // pred_check_branch
      %21 = sbr.rel (0) target = $region9
    $region8: #{tpu_custom_call.1} parent=1 // pred_region
      %22 = dma.done [#allocation6], 1536
    $region9: #{tpu_custom_call.1} parent=1 // pred_fallthru
      _
    %p23 = scmp.eq.s32.totalorder 0, 0
    // Predicated region
    $region10: #{tpu_custom_call.1} parent=1 // pred_check
      %p24 = pneg %p23
    $region11: #{tpu_custom_call.1} parent=1 // pred_check_branch
      %26 = sbr.rel (%p24) target = $region13
    $region12: #{tpu_custom_call.1} parent=1 // pred_region
      %vm27 = vcmask 162816
      %28 = vst.msk [vmem:[#allocation2] sm:$0xff] %vm27, 0.0
      %29 = vst.msk [vmem:[#allocation2 + $0x8] sm:$0xff] %vm27, 0.0
      %vm30 = vcmask 158720
      %31 = vst.msk [vmem:[#allocation2 + $0x10] sm:$0xf] %vm30, 0.0
      %32 = vst.msk [vmem:[#allocation2 + $0x18] sm:$0xff] %vm27, 0.0
      %33 = vst.msk [vmem:[#allocation2 + $0x20] sm:$0xff] %vm27, 0.0
      %34 = vst.msk [vmem:[#allocation2 + $0x28] sm:$0xf] %vm30, 0.0
    $region13: #{tpu_custom_call.1} parent=1 // pred_fallthru
      _
    %v35 = vld [vmem:[#allocation5] sm:$0xff]
    %v36 = vld [vmem:[#allocation5 + $0x8] sm:$0xff]
    %v37 = vld [vmem:[#allocation5 + $0x30] sm:$0xff]
    %v38 = vld [vmem:[#allocation5 + $0x38] sm:$0xff]
    %s39 = scalar_lea.vmem [#allocation5], 16
    %v40 = vld [vmem:[%s39] sm:$0xff]
    %v41 = vld [vmem:[%s39 + $0x8] sm:$0xff]
    %v42 = vld [vmem:[%s39 + $0x30] sm:$0xff]
    %v43 = vld [vmem:[%s39 + $0x38] sm:$0xff]
    %v44 = vadd.f32 %v35, %v40
    %v45 = vadd.f32 %v36, %v41
    %v46 = vadd.f32 %v37, %v42
    %v47 = vadd.f32 %v38, %v43
    %s48 = scalar_lea.vmem [#allocation5], 32
    %v49 = vld [vmem:[%s48] sm:$0xff]
    %v50 = vld [vmem:[%s48 + $0x8] sm:$0xff]
    %v51 = vld [vmem:[%s48 + $0x30] sm:$0xff]
    %v52 = vld [vmem:[%s48 + $0x38] sm:$0xff]
    %v53 = vadd.f32 %v44, %v49
    %v54 = vadd.f32 %v45, %v50
    %v55 = vadd.f32 %v46, %v51
    %v56 = vadd.f32 %v47, %v52
    %61 = vrot.lane.b32.xlu0 %v53, 2
    %v62 = vpop.permute.xlu0 %61
    %63 = vrot.lane.b32.xlu0 %v54, 2
    %v64 = vpop.permute.xlu0 %63
    %65 = vrot.lane.b32.xlu0 %v55, 2
    %v66 = vpop.permute.xlu0 %65
    %67 = vrot.lane.b32.xlu0 %v56, 2
    %v68 = vpop.permute.xlu0 %67
    %vm73 = vcmask 146448
    %74 = vst.msk [vmem:[#allocation2 + $0x2] sm:$0xff] %vm73, %v62
    %75 = vst.msk [vmem:[#allocation2 + $0xa] sm:$0xff] %vm73, %v64
    %76 = vst.msk [vmem:[#allocation2 + $0x1a] sm:$0xff] %vm73, %v66
    %77 = vst.msk [vmem:[#allocation2 + $0x22] sm:$0xff] %vm73, %v68
    %v78 = vld [vmem:[#allocation2] sm:$0xff]
    %v79 = vld [vmem:[#allocation2 + $0x8] sm:$0xff]
    %v80 = vld [vmem:[#allocation2 + $0x10] sm:$0xf]
    %v81 = vld [vmem:[#allocation2 + $0x18] sm:$0xff]
    %v82 = vld [vmem:[#allocation2 + $0x20] sm:$0xff]
    %v83 = vld [vmem:[#allocation2 + $0x28] sm:$0xf]
    %90 = vrot.lane.b32.xlu0 %v78, 126
    %v91 = vpop.permute.xlu0 %90
    %92 = vrot.lane.b32.xlu0 %v79, 126
    %v93 = vpop.permute.xlu0 %92
    %94 = vrot.lane.b32.xlu0 %v80, 126
    %v95 = vpop.permute.xlu0 %94
    %96 = vrot.lane.b32.xlu0 %v81, 126
    %v97 = vpop.permute.xlu0 %96
    %98 = vrot.lane.b32.xlu0 %v82, 126
    %v99 = vpop.permute.xlu0 %98
    %100 = vrot.lane.b32.xlu0 %v83, 126
    %v101 = vpop.permute.xlu0 %100
    %v108 = vadd.f32 %v78, %v91
    %v109 = vadd.f32 %v79, %v93
    %v110 = vadd.f32 %v80, %v95
    %v111 = vadd.f32 %v81, %v97
    %v112 = vadd.f32 %v82, %v99
    %v113 = vadd.f32 %v83, %v101
    %120 = vrot.lane.b32.xlu0 %v108, 127
    %v121 = vpop.permute.xlu0 %120
    %122 = vrot.lane.b32.xlu0 %v109, 127
    %v123 = vpop.permute.xlu0 %122
    %124 = vrot.lane.b32.xlu0 %v110, 127
    %v125 = vpop.permute.xlu0 %124
    %126 = vrot.lane.b32.xlu0 %v111, 127
    %v127 = vpop.permute.xlu0 %126
    %128 = vrot.lane.b32.xlu0 %v112, 127
    %v129 = vpop.permute.xlu0 %128
    %130 = vrot.lane.b32.xlu0 %v113, 127
    %v131 = vpop.permute.xlu0 %130
    %vm138 = vcmask 130048
    %139 = vst.msk [vmem:[#allocation3] sm:$0xff] %vm138, %v121
    %140 = vst.msk [vmem:[#allocation3 + $0x8] sm:$0xff] %vm138, %v123
    %vm141 = vcmask 125952
    %142 = vst.msk [vmem:[#allocation3 + $0x10] sm:$0xf] %vm141, %v125
    %143 = vst.msk [vmem:[#allocation3 + $0x18] sm:$0xff] %vm138, %v127
    %144 = vst.msk [vmem:[#allocation3 + $0x20] sm:$0xff] %vm138, %v129
    %145 = vst.msk [vmem:[#allocation3 + $0x28] sm:$0xf] %vm141, %v131
    %v146 = vld [vmem:[#allocation2] sm:$0xff]
    %v147 = vld [vmem:[#allocation2 + $0x8] sm:$0xff]
    %v148 = vld [vmem:[#allocation2 + $0x10] sm:$0xf]
    %v149 = vld [vmem:[#allocation2 + $0x18] sm:$0xff]
    %v150 = vld [vmem:[#allocation2 + $0x20] sm:$0xff]
    %v151 = vld [vmem:[#allocation2 + $0x28] sm:$0xf]
    %158 = vrot.lane.b32.xlu0 %v146, 124
    %v159 = vpop.permute.xlu0 %158
    %160 = vrot.lane.b32.xlu0 %v147, 124
    %v161 = vpop.permute.xlu0 %160
    %162 = vrot.lane.b32.xlu0 %v148, 124
    %v163 = vpop.permute.xlu0 %162
    %164 = vrot.lane.b32.xlu0 %v149, 124
    %v165 = vpop.permute.xlu0 %164
    %166 = vrot.lane.b32.xlu0 %v150, 124
    %v167 = vpop.permute.xlu0 %166
    %168 = vrot.lane.b32.xlu0 %v151, 124
    %v169 = vpop.permute.xlu0 %168
    %v176 = vadd.f32 %v146, %v159
    %v177 = vadd.f32 %v147, %v161
    %v178 = vadd.f32 %v148, %v163
    %v179 = vadd.f32 %v149, %v165
    %v180 = vadd.f32 %v150, %v167
    %v181 = vadd.f32 %v151, %v169
    %182 = vst.msk [vmem:[#allocation4] sm:$0xff] %vm138, %v176
    %183 = vst.msk [vmem:[#allocation4 + $0x8] sm:$0xff] %vm138, %v177
    %184 = vst.msk [vmem:[#allocation4 + $0x10] sm:$0xf] %vm141, %v178
    %185 = vst.msk [vmem:[#allocation4 + $0x18] sm:$0xff] %vm138, %v179
    %186 = vst.msk [vmem:[#allocation4 + $0x20] sm:$0xff] %vm138, %v180
    %187 = vst.msk [vmem:[#allocation4 + $0x28] sm:$0xf] %vm141, %v181
    %v188 = vld [vmem:[#allocation2 + $0x2] sm:$0xff]
    %v189 = vld [vmem:[#allocation2 + $0xa] sm:$0xff]
    %v190 = vld [vmem:[#allocation2 + $0x1a] sm:$0xff]
    %v191 = vld [vmem:[#allocation2 + $0x22] sm:$0xff]
    %v192 = vld [vmem:[#allocation3 + $0x2] sm:$0xff]
    %v193 = vld [vmem:[#allocation3 + $0xa] sm:$0xff]
    %v194 = vld [vmem:[#allocation3 + $0x1a] sm:$0xff]
    %v195 = vld [vmem:[#allocation3 + $0x22] sm:$0xff]
    %v196 = vmul.f32 %v192, 0.5
    %v197 = vmul.f32 %v193, 0.5
    %v198 = vmul.f32 %v194, 0.5
    %v199 = vmul.f32 %v195, 0.5
    %204 = vrot.lane.b32.xlu0 %v188, 126
    %v205 = vpop.permute.xlu0 %204
    %206 = vrot.lane.b32.xlu0 %v189, 126
    %v207 = vpop.permute.xlu0 %206
    %208 = vrot.lane.b32.xlu0 %v190, 126
    %v209 = vpop.permute.xlu0 %208
    %210 = vrot.lane.b32.xlu0 %v191, 126
    %v211 = vpop.permute.xlu0 %210
    %v216 = vsub.f32 %v196, %v205
    %v217 = vsub.f32 %v197, %v207
    %v218 = vsub.f32 %v198, %v209
    %v219 = vsub.f32 %v199, %v211
    %s220 = scalar_lea.vmem [#allocation8], 32
    %221 = vst.msk [vmem:[%s220] sm:$0xff] %vm138, %v216
    %222 = vst.msk [vmem:[%s220 + $0x8] sm:$0xff] %vm138, %v217
    %223 = vst.msk [vmem:[%s220 + $0x30] sm:$0xff] %vm138, %v218
    %224 = vst.msk [vmem:[%s220 + $0x38] sm:$0xff] %vm138, %v219
    %v225 = vld [vmem:[#allocation3 + $0x1] sm:$0xff]
    %v226 = vld [vmem:[#allocation3 + $0x9] sm:$0xff]
    %v227 = vld [vmem:[#allocation3 + $0x19] sm:$0xff]
    %v228 = vld [vmem:[#allocation3 + $0x21] sm:$0xff]
    %v229 = vld [vmem:[#allocation3 + $0x3] sm:$0xff]
    %v230 = vld [vmem:[#allocation3 + $0xb] sm:$0xff]
    %v231 = vld [vmem:[#allocation3 + $0x1b] sm:$0xff]
    %v232 = vld [vmem:[#allocation3 + $0x23] sm:$0xff]
    %v233 = vadd.f32 %v225, %v229
    %v234 = vadd.f32 %v226, %v230
    %v235 = vadd.f32 %v227, %v231
    %v236 = vadd.f32 %v228, %v232
    %v237 = vld [vmem:[#allocation2 + $0x1] sm:$0xff]
    %v238 = vld [vmem:[#allocation2 + $0x9] sm:$0xff]
    %v239 = vld [vmem:[#allocation2 + $0x19] sm:$0xff]
    %v240 = vld [vmem:[#allocation2 + $0x21] sm:$0xff]
    %v241 = vld [vmem:[#allocation2 + $0x3] sm:$0xff]
    %v242 = vld [vmem:[#allocation2 + $0xb] sm:$0xff]
    %v243 = vld [vmem:[#allocation2 + $0x1b] sm:$0xff]
    %v244 = vld [vmem:[#allocation2 + $0x23] sm:$0xff]
    %v245 = vadd.f32 %v237, %v241
    %v246 = vadd.f32 %v238, %v242
    %v247 = vadd.f32 %v239, %v243
    %v248 = vadd.f32 %v240, %v244
    %253 = vrot.lane.b32.xlu0 %v192, 2
    %v254 = vpop.permute.xlu0 %253
    %255 = vrot.lane.b32.xlu0 %v193, 2
    %v256 = vpop.permute.xlu0 %255
    %257 = vrot.lane.b32.xlu0 %v194, 2
    %v258 = vpop.permute.xlu0 %257
    %259 = vrot.lane.b32.xlu0 %v195, 2
    %v260 = vpop.permute.xlu0 %259
    %v265 = vadd.f32 %v245, %v254
    %v266 = vadd.f32 %v246, %v256
    %v267 = vadd.f32 %v247, %v258
    %v268 = vadd.f32 %v248, %v260
    %v269 = vmul.f32 %v265, 0.5
    %v270 = vmul.f32 %v266, 0.5
    %v271 = vmul.f32 %v267, 0.5
    %v272 = vmul.f32 %v268, 0.5
    %v273 = vmul.f32 %v233, 0.25
    %v274 = vmul.f32 %v234, 0.25
    %v275 = vmul.f32 %v235, 0.25
    %v276 = vmul.f32 %v236, 0.25
    %281 = vrot.lane.b32.xlu0 %v273, 2
    %v282 = vpop.permute.xlu0 %281
    %283 = vrot.lane.b32.xlu0 %v274, 2
    %v284 = vpop.permute.xlu0 %283
    %285 = vrot.lane.b32.xlu0 %v275, 2
    %v286 = vpop.permute.xlu0 %285
    %287 = vrot.lane.b32.xlu0 %v276, 2
    %v288 = vpop.permute.xlu0 %287
    %v293 = vsub.f32 %v269, %v282
    %v294 = vsub.f32 %v270, %v284
    %v295 = vsub.f32 %v271, %v286
    %v296 = vsub.f32 %v272, %v288
    %v297 = vsub.f32 %v293, %v188
    %v298 = vsub.f32 %v294, %v189
    %v299 = vsub.f32 %v295, %v190
    %v300 = vsub.f32 %v296, %v191
    %305 = vrot.lane.b32.xlu0 %v297, 126
    %v306 = vpop.permute.xlu0 %305
    %307 = vrot.lane.b32.xlu0 %v298, 126
    %v308 = vpop.permute.xlu0 %307
    %309 = vrot.lane.b32.xlu0 %v299, 126
    %v310 = vpop.permute.xlu0 %309
    %311 = vrot.lane.b32.xlu0 %v300, 126
    %v312 = vpop.permute.xlu0 %311
    %317 = vst.msk [vmem:[#allocation8] sm:$0xff] %vm138, %v306
    %318 = vst.msk [vmem:[#allocation8 + $0x8] sm:$0xff] %vm138, %v308
    %319 = vst.msk [vmem:[#allocation8 + $0x30] sm:$0xff] %vm138, %v310
    %320 = vst.msk [vmem:[#allocation8 + $0x38] sm:$0xff] %vm138, %v312
    %v321 = vld [vmem:[#allocation4] sm:$0xff]
    %v322 = vld [vmem:[#allocation4 + $0x8] sm:$0xff]
    %v323 = vld [vmem:[#allocation4 + $0x18] sm:$0xff]
    %v324 = vld [vmem:[#allocation4 + $0x20] sm:$0xff]
    %v325 = vld [vmem:[#allocation4 + $0x4] sm:$0xff]
    %v326 = vld [vmem:[#allocation4 + $0xc] sm:$0xff]
    %v327 = vld [vmem:[#allocation4 + $0x1c] sm:$0xff]
    %v328 = vld [vmem:[#allocation4 + $0x24] sm:$0xff]
    %v329 = vadd.f32 %v321, %v325
    %v330 = vadd.f32 %v322, %v326
    %v331 = vadd.f32 %v323, %v327
    %v332 = vadd.f32 %v324, %v328
    %v333 = vld [vmem:[#allocation3] sm:$0xff]
    %v334 = vld [vmem:[#allocation3 + $0x8] sm:$0xff]
    %v335 = vld [vmem:[#allocation3 + $0x18] sm:$0xff]
    %v336 = vld [vmem:[#allocation3 + $0x20] sm:$0xff]
    %v337 = vld [vmem:[#allocation3 + $0x4] sm:$0xff]
    %v338 = vld [vmem:[#allocation3 + $0xc] sm:$0xff]
    %v339 = vld [vmem:[#allocation3 + $0x1c] sm:$0xff]
    %v340 = vld [vmem:[#allocation3 + $0x24] sm:$0xff]
    %v341 = vadd.f32 %v333, %v337
    %v342 = vadd.f32 %v334, %v338
    %v343 = vadd.f32 %v335, %v339
    %v344 = vadd.f32 %v336, %v340
    %v345 = vld [vmem:[#allocation4 + $0x1] sm:$0xff]
    %v346 = vld [vmem:[#allocation4 + $0x9] sm:$0xff]
    %v347 = vld [vmem:[#allocation4 + $0x19] sm:$0xff]
    %v348 = vld [vmem:[#allocation4 + $0x21] sm:$0xff]
    %v349 = vld [vmem:[#allocation4 + $0x3] sm:$0xff]
    %v350 = vld [vmem:[#allocation4 + $0xb] sm:$0xff]
    %v351 = vld [vmem:[#allocation4 + $0x1b] sm:$0xff]
    %v352 = vld [vmem:[#allocation4 + $0x23] sm:$0xff]
    %v353 = vadd.f32 %v345, %v349
    %v354 = vadd.f32 %v346, %v350
    %v355 = vadd.f32 %v347, %v351
    %v356 = vadd.f32 %v348, %v352
    %v357 = vadd.f32 %v341, %v353
    %v358 = vadd.f32 %v342, %v354
    %v359 = vadd.f32 %v343, %v355
    %v360 = vadd.f32 %v344, %v356
    %v361 = vld [vmem:[#allocation2] sm:$0xff]
    %v362 = vld [vmem:[#allocation2 + $0x8] sm:$0xff]
    %v363 = vld [vmem:[#allocation2 + $0x18] sm:$0xff]
    %v364 = vld [vmem:[#allocation2 + $0x20] sm:$0xff]
    %v365 = vld [vmem:[#allocation2 + $0x4] sm:$0xff]
    %v366 = vld [vmem:[#allocation2 + $0xc] sm:$0xff]
    %v367 = vld [vmem:[#allocation2 + $0x1c] sm:$0xff]
    %v368 = vld [vmem:[#allocation2 + $0x24] sm:$0xff]
    %v369 = vadd.f32 %v361, %v365
    %v370 = vadd.f32 %v362, %v366
    %v371 = vadd.f32 %v363, %v367
    %v372 = vadd.f32 %v364, %v368
    %v373 = vld [vmem:[#allocation4 + $0x2] sm:$0xff]
    %v374 = vld [vmem:[#allocation4 + $0xa] sm:$0xff]
    %v375 = vld [vmem:[#allocation4 + $0x1a] sm:$0xff]
    %v376 = vld [vmem:[#allocation4 + $0x22] sm:$0xff]
    %381 = vrot.lane.b32.xlu0 %v373, 2
    %v382 = vpop.permute.xlu0 %381
    %383 = vrot.lane.b32.xlu0 %v374, 2
    %v384 = vpop.permute.xlu0 %383
    %385 = vrot.lane.b32.xlu0 %v375, 2
    %v386 = vpop.permute.xlu0 %385
    %387 = vrot.lane.b32.xlu0 %v376, 2
    %v388 = vpop.permute.xlu0 %387
    %v393 = vadd.f32 %v369, %v382
    %v394 = vadd.f32 %v370, %v384
    %v395 = vadd.f32 %v371, %v386
    %v396 = vadd.f32 %v372, %v388
    %v397 = vmul.f32 %v265, 0.6666667
    %v398 = vmul.f32 %v266, 0.6666667
    %v399 = vmul.f32 %v267, 0.6666667
    %v400 = vmul.f32 %v268, 0.6666667
    %v401 = vmul.f32 %v233, 0.5
    %v402 = vmul.f32 %v234, 0.5
    %v403 = vmul.f32 %v235, 0.5
    %v404 = vmul.f32 %v236, 0.5
    %409 = vrot.lane.b32.xlu0 %v401, 2
    %v410 = vpop.permute.xlu0 %409
    %411 = vrot.lane.b32.xlu0 %v402, 2
    %v412 = vpop.permute.xlu0 %411
    %413 = vrot.lane.b32.xlu0 %v403, 2
    %v414 = vpop.permute.xlu0 %413
    %415 = vrot.lane.b32.xlu0 %v404, 2
    %v416 = vpop.permute.xlu0 %415
    %v421 = vsub.f32 %v397, %v410
    %v422 = vsub.f32 %v398, %v412
    %v423 = vsub.f32 %v399, %v414
    %v424 = vsub.f32 %v400, %v416
    %v425 = vsub.f32 %v421, %v188
    %v426 = vsub.f32 %v422, %v189
    %v427 = vsub.f32 %v423, %v190
    %v428 = vsub.f32 %v424, %v191
    %v429 = vmul.f32 %v357, 0.16666667
    %v430 = vmul.f32 %v358, 0.16666667
    %v431 = vmul.f32 %v359, 0.16666667
    %v432 = vmul.f32 %v360, 0.16666667
    %v433 = vmul.f32 %v329, 0.083333336
    %v434 = vmul.f32 %v330, 0.083333336
    %v435 = vmul.f32 %v331, 0.083333336
    %v436 = vmul.f32 %v332, 0.083333336
    %v437 = vsub.f32 %v429, %v433
    %v438 = vsub.f32 %v430, %v434
    %v439 = vsub.f32 %v431, %v435
    %v440 = vsub.f32 %v432, %v436
    %v441 = vmul.f32 %v393, 0.16666667
    %v442 = vmul.f32 %v394, 0.16666667
    %v443 = vmul.f32 %v395, 0.16666667
    %v444 = vmul.f32 %v396, 0.16666667
    %449 = vrot.lane.b32.xlu0 %v441, 126
    %v450 = vpop.permute.xlu0 %449
    %451 = vrot.lane.b32.xlu0 %v442, 126
    %v452 = vpop.permute.xlu0 %451
    %453 = vrot.lane.b32.xlu0 %v443, 126
    %v454 = vpop.permute.xlu0 %453
    %455 = vrot.lane.b32.xlu0 %v444, 126
    %v456 = vpop.permute.xlu0 %455
    %v461 = vsub.f32 %v437, %v450
    %v462 = vsub.f32 %v438, %v452
    %v463 = vsub.f32 %v439, %v454
    %v464 = vsub.f32 %v440, %v456
    %469 = vrot.lane.b32.xlu0 %v461, 2
    %v470 = vpop.permute.xlu0 %469
    %471 = vrot.lane.b32.xlu0 %v462, 2
    %v472 = vpop.permute.xlu0 %471
    %473 = vrot.lane.b32.xlu0 %v463, 2
    %v474 = vpop.permute.xlu0 %473
    %475 = vrot.lane.b32.xlu0 %v464, 2
    %v476 = vpop.permute.xlu0 %475
    %v481 = vadd.f32 %v425, %v470
    %v482 = vadd.f32 %v426, %v472
    %v483 = vadd.f32 %v427, %v474
    %v484 = vadd.f32 %v428, %v476
    %489 = vrot.lane.b32.xlu0 %v481, 126
    %v490 = vpop.permute.xlu0 %489
    %491 = vrot.lane.b32.xlu0 %v482, 126
    %v492 = vpop.permute.xlu0 %491
    %493 = vrot.lane.b32.xlu0 %v483, 126
    %v494 = vpop.permute.xlu0 %493
    %495 = vrot.lane.b32.xlu0 %v484, 126
    %v496 = vpop.permute.xlu0 %495
    %s501 = scalar_lea.vmem [#allocation8], 16
    %502 = vst.msk [vmem:[%s501] sm:$0xff] %vm138, %v490
    %503 = vst.msk [vmem:[%s501 + $0x8] sm:$0xff] %vm138, %v492
    %504 = vst.msk [vmem:[%s501 + $0x30] sm:$0xff] %vm138, %v494
    %505 = vst.msk [vmem:[%s501 + $0x38] sm:$0xff] %vm138, %v496
    // Predicated region
    $region14: #{tpu_custom_call.1} parent=1 // pred_check
      _
    $region15: #{tpu_custom_call.1} parent=1 // pred_check_branch
      %507 = sbr.rel (0) target = $region17
    $region16: #{tpu_custom_call.1} parent=1 // pred_region
      %s509 = ssub.s32 1536, 1536
      %510 = vsyncadd [#allocation7], %s509
      %s511 = sshll.u32 [#allocation8], 4
      %s512 = int_to_ptr.vmem [resolvable:$true] %s511
      %517 = dma.vmem_to_hbm [thread:$0]  %s512, 1536, %s1, [#allocation7], 128, 128, 8
    $region17: #{tpu_custom_call.1} parent=1 // pred_fallthru
      _
    // Predicated region
    $region18: #{tpu_custom_call.1} parent=1 // pred_check
      _
    $region19: #{tpu_custom_call.1} parent=1 // pred_check_branch
      %519 = sbr.rel (0) target = $region21
    $region20: #{tpu_custom_call.1} parent=1 // pred_region
      %520 = dma.done [#allocation7], 1536
    $region21: #{tpu_custom_call.1} parent=1 // pred_fallthru
      _
    %521 = vsyncpa [#allocation6], 1
    %522 = vsyncpa [#allocation7], 1

</llo_original>
